<compile_context>
chip_gen: v7x
topology: tpu7x:2x2x1
jax: 0.10.0
libtpu: 0.0.40
codegen_flags: <defaults>
</compile_context>

<pallas_src>
import functools

import jax
import jax.numpy as jnp
from jax.experimental import pallas as pl
from jax.experimental.pallas import tpu as pltpu


# ----------------------------------------------------------------------------
# Kernel 1: per-(B*C)-plane spatial means for both images (HBM-bound part).
# ----------------------------------------------------------------------------
def _mean_color_kernel(o_ref, g_ref, om_ref, gm_ref, *, inv_hw, hw, t_hw,
                       mask_tail):
    # o_ref / g_ref: (tb, t_hw) lane-dense VMEM blocks.
    # om_ref / gm_ref: (tb, 1) resident accumulators (same block across j).
    j = pl.program_id(1)
    nj = pl.num_programs(1)

    @pl.when(j == 0)
    def _():
        om_ref[...] = jnp.zeros_like(om_ref)
        gm_ref[...] = jnp.zeros_like(gm_ref)

    o = o_ref[...].astype(jnp.float32)
    g = g_ref[...].astype(jnp.float32)

    if mask_tail:
        # HW is not a multiple of t_hw: zero out-of-range columns so the tail
        # block does not pollute the accumulator.  Cheap VPU work, fully hidden
        # under the DMA of this memory-bound kernel.
        col = jax.lax.broadcasted_iota(jnp.int32, o.shape, dimension=1)
        valid = (j * t_hw + col) < hw
        o = jnp.where(valid, o, 0.0)
        g = jnp.where(valid, g, 0.0)

    om_ref[...] += jnp.sum(o, axis=-1, keepdims=True)
    gm_ref[...] += jnp.sum(g, axis=-1, keepdims=True)

    @pl.when(j == nj - 1)
    def _():
        # Fold the 1/(H*W) mean scaling in here (free VPU work) so the wrapper
        # needs no extra XLA ops between the two pallas_calls.
        om_ref[...] = om_ref[...] * jnp.float32(inv_hw)
        gm_ref[...] = gm_ref[...] * jnp.float32(inv_hw)


# ----------------------------------------------------------------------------
# Kernel 2: hue-rotation harmony + squared color distance (tiny, VPU-only).
# Mean colors arrive as (B, 3): batch on sublanes, channels on lanes.
# ----------------------------------------------------------------------------
_ONE_SIXTH = 1.0 / 6.0
_ONE_THIRD = 1.0 / 3.0
_HALF = 0.5
_TWO_THIRDS = 2.0 / 3.0
_FIVE_SIXTHS = 5.0 / 6.0


def _mod(a, n):
    # Python/torch-style remainder for positive divisor n (result in [0, n)).
    return a - jnp.floor(a / n) * n


def _rgb_to_hsv(r, g, b):
    mx = jnp.maximum(jnp.maximum(r, g), b)
    mn = jnp.minimum(jnp.minimum(r, g), b)
    diff = mx - mn
    h = jnp.where(
        mx == mn, jnp.zeros_like(r),
        jnp.where(mx == r, _mod((g - b) / diff, 6.0),
                  jnp.where(mx == g, (b - r) / diff + 2.0,
                            (r - g) / diff + 4.0)))
    h = h / 6.0
    s = jnp.where(mx == 0.0, jnp.zeros_like(r), diff / mx)
    v = mx
    return h, s, v


def _hsv_to_rgb(h, s, v):
    # Faithful reproduction of the PyTorch module's band logic (including its
    # non-standard blue band handling) — intentional, not standard HSV.
    c = v * s
    x = c * (1.0 - jnp.abs(_mod(h * 6.0, 2.0) - 1.0))
    m = v - c

    def band(lo, hi, inclusive_hi=False):
        hi_ok = (h <= hi) if inclusive_hi else (h < hi)
        return jnp.logical_and(h >= lo, hi_ok)

    r = jnp.where(band(0.0, _ONE_SIXTH), c, x)
    g = jnp.where(band(_ONE_SIXTH, _ONE_THIRD), x, c)
    b = jnp.where(band(_ONE_THIRD, _HALF), c, x)
    r = jnp.where(band(_HALF, _TWO_THIRDS), x, r)
    g = jnp.where(band(_TWO_THIRDS, _FIVE_SIXTHS), c, g)
    b = jnp.where(band(_ONE_THIRD, _HALF), x, b)
    r = jnp.where(band(_FIVE_SIXTHS, 1.0, True), c, r)
    g = jnp.where(band(_FIVE_SIXTHS, 1.0, True), x, g)
    b = jnp.where(band(_FIVE_SIXTHS, 1.0, True), x, b)
    return r + m, g + m, b + m


def _rotate_hue(r, g, b, angle):
    h, s, v = _rgb_to_hsv(r, g, b)
    h = _mod(h + angle, 1.0)
    return _hsv_to_rgb(h, s, v)


def _harmony_loss_kernel(oc_ref, gc_ref, out_ref):
    oc = oc_ref[...].astype(jnp.float32)   # (B, 3) mean colors
    gc = gc_ref[...].astype(jnp.float32)   # (B, 3)
    o_r, o_g, o_b = oc[:, 0:1], oc[:, 1:2], oc[:, 2:3]
    g_r, g_g, g_b = gc[:, 0:1], gc[:, 1:2], gc[:, 2:3]

    total = jnp.zeros_like(o_r)            # (B, 1) per-batch squared distances
    for angle in (_ONE_THIRD, _TWO_THIRDS):
        orr, org, orb = _rotate_hue(o_r, o_g, o_b, angle)
        grr, grg, grb = _rotate_hue(g_r, g_g, g_b, angle)
        total = total + (orr - grr) ** 2 + (org - grg) ** 2 + (orb - grb) ** 2

    bsz = total.shape[0]
    out_ref[0] = jnp.sum(total) * jnp.float32(1.0 / bsz)   # mean over batch


# ----------------------------------------------------------------------------
# Tiling / VMEM-budget helpers
# ----------------------------------------------------------------------------
def _vmem_capacity_bytes(default=64 * 1024 * 1024):
    # Conservative default (v7x per-TC VMEM) if the query is unavailable.
    try:
        cap = int(getattr(pltpu.get_tpu_info(), "vmem_capacity_bytes", 0))
        if cap > 0:
            return cap
    except Exception:
        pass
    return default


def _choose_tiling(BC, HW, itemsize, block_budget_bytes):
    """Pick (tb, t_hw) for the (BC, HW) layout.

    Constraints: tb is a multiple of 8 or equals BC; t_hw is a multiple of 128
    or equals HW.  block_budget_bytes is the budget for ONE input block (the
    real pipeline footprint is 2 inputs x 2 buffers x block).
    """
    row_bytes = HW * itemsize
    rows_fit = int(block_budget_bytes // row_bytes)

    if rows_fit >= BC:
        tb, t_hw = BC, HW
    elif rows_fit >= 8:
        tb, t_hw = (rows_fit // 8) * 8, HW
    else:
        # Even 8 full rows don't fit: chunk the spatial axis too (accumulator
        # grid axis), making VMEM use independent of image size.
        tb = BC if BC < 8 else 8
        cols_fit = int(block_budget_bytes // (tb * itemsize))
        t_hw = min(HW, max(128, (cols_fit // 128) * 128))

    # Megacore: guarantee >=2 "parallel" grid steps so both v7x TensorCores
    # participate (harmless single extra step on 1-TC chips).
    if BC >= 16 and pl.cdiv(BC, tb) < 2:
        tb = ((pl.cdiv(BC, 2) + 7) // 8) * 8

    return tb, t_hw


# ----------------------------------------------------------------------------
# Wrapper
# ----------------------------------------------------------------------------
def color_harmony_loss(original, generated):
    """Pallas implementation of ColorHarmonyLoss.forward."""
    assert original.shape == generated.shape and original.ndim == 4
    B, C, H, W = original.shape
    assert C == 3, "ColorHarmonyLoss assumes RGB inputs (C == 3)."
    BC = B * C
    HW = H * W

    # Lane-dense flattening (free for contiguous row-major data): spatial dims
    # map entirely onto the 128-lane axis -> fully contiguous, unmasked DMA.
    o = original.reshape(BC, HW)
    g = generated.reshape(BC, HW)

    itemsize = jnp.dtype(original.dtype).itemsize

    # Budget the REAL pipeline footprint: 2 inputs x 2 pipeline buffers x block.
    vmem_cap = _vmem_capacity_bytes()
    total_budget = (3 * vmem_cap) // 4          # ~48 MiB on v7x, ~96 MiB on v6e
    block_budget = total_budget // (2 * 2)      # ~12 MiB / ~24 MiB per input
    vmem_limit = min((7 * vmem_cap) // 8, vmem_cap - 8 * 1024 * 1024)

    tb, t_hw = _choose_tiling(BC, HW, itemsize, block_budget)
    num_bc_blocks = pl.cdiv(BC, tb)
    num_hw_blocks = pl.cdiv(HW, t_hw)
    mask_tail = (HW % t_hw) != 0

    kernel = functools.partial(
        _mean_color_kernel,
        inv_hw=1.0 / float(HW), hw=HW, t_hw=t_hw, mask_tail=mask_tail)

    flops = 2 * BC * HW + 4 * BC
    bytes_accessed = 2 * BC * HW * itemsize + 2 * BC * 4

    # TODO(synk): on v7x with many small HW chunks, pipeline_mode=pl.Buffered(3)
    # on the two input specs can hide extra DMA latency (still within budget).
    means_o, means_g = pl.pallas_call(
        kernel,
        out_shape=(jax.ShapeDtypeStruct((BC, 1), jnp.float32),
                   jax.ShapeDtypeStruct((BC, 1), jnp.float32)),
        grid_spec=pltpu.PrefetchScalarGridSpec(
            num_scalar_prefetch=0,
            grid=(num_bc_blocks, num_hw_blocks),   # reduction axis last
            in_specs=[pl.BlockSpec((tb, t_hw), lambda i, j: (i, j)),
                      pl.BlockSpec((tb, t_hw), lambda i, j: (i, j))],
            out_specs=[pl.BlockSpec((tb, 1), lambda i, j: (i, 0)),
                       pl.BlockSpec((tb, 1), lambda i, j: (i, 0))],
        ),
        compiler_params=pltpu.CompilerParams(
            dimension_semantics=("parallel", "arbitrary"),
            vmem_limit_bytes=int(vmem_limit),
        ),
        cost_estimate=pl.CostEstimate(flops=flops, transcendentals=0,
                                      bytes_accessed=bytes_accessed),
    )(o, g)

    # Means are already scaled in-kernel; only a trivial reshape remains.
    oc = means_o.reshape(B, C)
    gc = means_g.reshape(B, C)

    loss = pl.pallas_call(
        _harmony_loss_kernel,
        out_shape=jax.ShapeDtypeStruct((1,), jnp.float32),
        grid_spec=pltpu.PrefetchScalarGridSpec(
            num_scalar_prefetch=0,
            grid=(1,),
            in_specs=[pl.BlockSpec((B, C), lambda i: (0, 0)),
                      pl.BlockSpec((B, C), lambda i: (0, 0))],
            out_specs=pl.BlockSpec(memory_space=pltpu.MemorySpace.SMEM),
        ),
    )(oc, gc)
    return loss[0]


# ----------------------------------------------------------------------------
# Pure-JAX reference mirroring the PyTorch module (for sanity check).
# ----------------------------------------------------------------------------
def _reference_loss(original, generated):
    def rgb_to_hsv(color):
        r, g, b = color[0], color[1], color[2]
        mx = jnp.max(color)
        mn = jnp.min(color)
        diff = mx - mn
        h = jnp.where(mx == mn, 0.0,
                      jnp.where(mx == r, ((g - b) / diff) % 6,
                                jnp.where(mx == g, (b - r) / diff + 2,
                                          (r - g) / diff + 4)))
        h = h / 6
        s = jnp.where(mx == 0, 0.0, diff / mx)
        v = mx
        return jnp.stack([h, s, v])

    def hsv_to_rgb(color):
        h, s, v = color[0], color[1], color[2]
        c = v * s
        x = c * (1 - jnp.abs(h * 6 % 2 - 1))
        m = v - c
        r = jnp.where((0 <= h) & (h < 1 / 6), c, x)
        g = jnp.where((1 / 6 <= h) & (h < 1 / 3), x, c)
        b = jnp.where((1 / 3 <= h) & (h < 1 / 2), c, x)
        r = jnp.where((1 / 2 <= h) & (h < 2 / 3), x, r)
        g = jnp.where((2 / 3 <= h) & (h < 5 / 6), c, g)
        b = jnp.where((1 / 3 <= h) & (h < 1 / 2), x, b)
        r = jnp.where((5 / 6 <= h) & (h <= 1), c, r)
        g = jnp.where((5 / 6 <= h) & (h <= 1), x, g)
        b = jnp.where((5 / 6 <= h) & (h <= 1), x, b)
        return jnp.stack([r + m, g + m, b + m])

    def rotate_hue(color, angle):
        hsv = rgb_to_hsv(color)
        hsv = hsv.at[0].set((hsv[0] + angle) % 1)
        return hsv_to_rgb(hsv)

    def harmony_fn(color):
        return jnp.stack([rotate_hue(color, 1 / 3), rotate_hue(color, 2 / 3)])

    oc = original.mean(axis=(2, 3))
    gc = generated.mean(axis=(2, 3))
    bsz = original.shape[0]
    total = jnp.float32(0.0)
    for b in range(bsz):
        oh = harmony_fn(oc[b])
        gh = harmony_fn(gc[b])
        total = total + jnp.sum((oh - gh) ** 2)
    return total / bsz


if __name__ == "__main__":
    key = jax.random.PRNGKey(0)
    k1, k2 = jax.random.split(key)
    B, C, H, W = 2, 3, 16, 16
    x = jax.random.uniform(k1, (B, C, H, W), dtype=jnp.float32)
    t = jax.random.uniform(k2, (B, C, H, W), dtype=jnp.float32)

    loss = jax.block_until_ready(color_harmony_loss(x, t))
    ref = jax.block_until_ready(_reference_loss(x, t))

    assert jnp.allclose(loss, ref, rtol=1e-4, atol=1e-5), (loss, ref)
    print("KERNEL_OK")
</pallas_src>

<mosaic_0001>
module attributes {stable_mosaic.version = 11 : i64} {
  func.func @_mean_color_kernel(%arg0: i32, %arg1: i32, %arg2: memref<6x256xf32, #tpu.memory_space<vmem>>, %arg3: memref<6x256xf32, #tpu.memory_space<vmem>>, %arg4: memref<6x1xf32, #tpu.memory_space<vmem>>, %arg5: memref<6x1xf32, #tpu.memory_space<vmem>>) attributes {dimension_semantics = [#tpu.dimension_semantics<parallel>, #tpu.dimension_semantics<arbitrary>], iteration_bounds = array<i64: 1, 1>, scalar_prefetch = 0 : i64, scratch_operands = 0 : i64, tpu.core_type = #tpu.core_type<tc>, window_params = [{transform_indices = @transform_0, window_bounds = array<i64: 6, 256>}, {transform_indices = @transform_1, window_bounds = array<i64: 6, 256>}, {transform_indices = @transform_2, window_bounds = array<i64: 6, 1>}, {transform_indices = @transform_3, window_bounds = array<i64: 6, 1>}]} {
    %c0_i32 = arith.constant 0 : i32
    %0 = arith.cmpi eq, %arg1, %c0_i32 : i32
    %1 = arith.extui %0 : i1 to i32
    %c0_i32_0 = arith.constant 0 : i32
    %2 = arith.cmpi ne, %1, %c0_i32_0 : i32
    scf.if %2 {
      %cst_15 = arith.constant 0.000000e+00 : f32
      %18 = vector.broadcast %cst_15 : f32 to vector<6x1xf32>
      %c0_16 = arith.constant 0 : index
      %c0_17 = arith.constant 0 : index
      %19 = vector.load %arg4[%c0_16, %c0_17] : memref<6x1xf32, #tpu.memory_space<vmem>>, vector<6x1xf32>
      tpu.vector_store %arg4[%c0_16, %c0_17], %18 {strides = array<i32>} : memref<6x1xf32, #tpu.memory_space<vmem>>, vector<6x1xf32>,
      %cst_18 = arith.constant 0.000000e+00 : f32
      %20 = vector.broadcast %cst_18 : f32 to vector<6x1xf32>
      %c0_19 = arith.constant 0 : index
      %c0_20 = arith.constant 0 : index
      %21 = vector.load %arg5[%c0_19, %c0_20] : memref<6x1xf32, #tpu.memory_space<vmem>>, vector<6x1xf32>
      tpu.vector_store %arg5[%c0_19, %c0_20], %20 {strides = array<i32>} : memref<6x1xf32, #tpu.memory_space<vmem>>, vector<6x1xf32>,
    } else {
    }
    %c0 = arith.constant 0 : index
    %c0_1 = arith.constant 0 : index
    %3 = vector.load %arg2[%c0, %c0_1] : memref<6x256xf32, #tpu.memory_space<vmem>>, vector<6x256xf32>
    %c0_2 = arith.constant 0 : index
    %c0_3 = arith.constant 0 : index
    %4 = vector.load %arg3[%c0_2, %c0_3] : memref<6x256xf32, #tpu.memory_space<vmem>>, vector<6x256xf32>
    %c0_4 = arith.constant 0 : index
    %c0_5 = arith.constant 0 : index
    %5 = vector.load %arg4[%c0_4, %c0_5] : memref<6x1xf32, #tpu.memory_space<vmem>>, vector<6x1xf32>
    %cst = arith.constant dense<0.000000e+00> : vector<6xf32>
    %6 = vector.multi_reduction <add>, %3, %cst [1] : vector<6x256xf32> to vector<6xf32>
    %7 = vector.shape_cast %6 : vector<6xf32> to vector<6x1xf32>
    %8 = arith.addf %5, %7 : vector<6x1xf32>
    %c0_6 = arith.constant 0 : index
    %c0_7 = arith.constant 0 : index
    %9 = vector.load %arg4[%c0_6, %c0_7] : memref<6x1xf32, #tpu.memory_space<vmem>>, vector<6x1xf32>
    tpu.vector_store %arg4[%c0_6, %c0_7], %8 {strides = array<i32>} : memref<6x1xf32, #tpu.memory_space<vmem>>, vector<6x1xf32>,
    %c0_8 = arith.constant 0 : index
    %c0_9 = arith.constant 0 : index
    %10 = vector.load %arg5[%c0_8, %c0_9] : memref<6x1xf32, #tpu.memory_space<vmem>>, vector<6x1xf32>
    %cst_10 = arith.constant dense<0.000000e+00> : vector<6xf32>
    %11 = vector.multi_reduction <add>, %4, %cst_10 [1] : vector<6x256xf32> to vector<6xf32>
    %12 = vector.shape_cast %11 : vector<6xf32> to vector<6x1xf32>
    %13 = arith.addf %10, %12 : vector<6x1xf32>
    %c0_11 = arith.constant 0 : index
    %c0_12 = arith.constant 0 : index
    %14 = vector.load %arg5[%c0_11, %c0_12] : memref<6x1xf32, #tpu.memory_space<vmem>>, vector<6x1xf32>
    tpu.vector_store %arg5[%c0_11, %c0_12], %13 {strides = array<i32>} : memref<6x1xf32, #tpu.memory_space<vmem>>, vector<6x1xf32>,
    %c0_i32_13 = arith.constant 0 : i32
    %15 = arith.cmpi eq, %arg1, %c0_i32_13 : i32
    %16 = arith.extui %15 : i1 to i32
    %c0_i32_14 = arith.constant 0 : i32
    %17 = arith.cmpi ne, %16, %c0_i32_14 : i32
    scf.if %17 {
      %c0_15 = arith.constant 0 : index
      %c0_16 = arith.constant 0 : index
      %18 = vector.load %arg4[%c0_15, %c0_16] : memref<6x1xf32, #tpu.memory_space<vmem>>, vector<6x1xf32>
      %cst_17 = arith.constant 3.906250e-03 : f32
      %19 = vector.broadcast %cst_17 : f32 to vector<6x1xf32>
      %20 = arith.mulf %18, %19 : vector<6x1xf32>
      %c0_18 = arith.constant 0 : index
      %c0_19 = arith.constant 0 : index
      %21 = vector.load %arg4[%c0_18, %c0_19] : memref<6x1xf32, #tpu.memory_space<vmem>>, vector<6x1xf32>
      tpu.vector_store %arg4[%c0_18, %c0_19], %20 {strides = array<i32>} : memref<6x1xf32, #tpu.memory_space<vmem>>, vector<6x1xf32>,
      %c0_20 = arith.constant 0 : index
      %c0_21 = arith.constant 0 : index
      %22 = vector.load %arg5[%c0_20, %c0_21] : memref<6x1xf32, #tpu.memory_space<vmem>>, vector<6x1xf32>
      %cst_22 = arith.constant 3.906250e-03 : f32
      %23 = vector.broadcast %cst_22 : f32 to vector<6x1xf32>
      %24 = arith.mulf %22, %23 : vector<6x1xf32>
      %c0_23 = arith.constant 0 : index
      %c0_24 = arith.constant 0 : index
      %25 = vector.load %arg5[%c0_23, %c0_24] : memref<6x1xf32, #tpu.memory_space<vmem>>, vector<6x1xf32>
      tpu.vector_store %arg5[%c0_23, %c0_24], %24 {strides = array<i32>} : memref<6x1xf32, #tpu.memory_space<vmem>>, vector<6x1xf32>,
    } else {
    }
    return
  }
  func.func @transform_0(%arg0: i32, %arg1: i32) -> (i32, i32) {
    %c0_i32 = arith.constant 0 : i32
    return %arg0, %arg1 : i32, i32
  }
  func.func @transform_1(%arg0: i32, %arg1: i32) -> (i32, i32) {
    %c0_i32 = arith.constant 0 : i32
    return %arg0, %arg1 : i32, i32
  }
  func.func @transform_2(%arg0: i32, %arg1: i32) -> (i32, i32) {
    %c0_i32 = arith.constant 0 : i32
    %c0_i32_0 = arith.constant 0 : i32
    return %arg0, %c0_i32 : i32, i32
  }
  func.func @transform_3(%arg0: i32, %arg1: i32) -> (i32, i32) {
    %c0_i32 = arith.constant 0 : i32
    %c0_i32_0 = arith.constant 0 : i32
    return %arg0, %c0_i32 : i32, i32
  }
}

</mosaic_0001>

<llo_original>
// kernel: tpu_custom_call.1
$region0: #{tpu_custom_call.1}
  #allocation0 [shape = 'u32[]', space=smem, size = 0x4, offset = 0x4, fixed_abs, tag = 'smem constant byte address 0x4 - core index']
  #allocation1 [shape = 'u32[144,128]{1,0:T(1,128)}', space=vmem, size = 0x12000, scoped, tag = 'internal scratch']
  %s0 = inlined_call_operand.hbm [shape: f32[6,256], index: 0, kind: input, shape index: {}]
  %s1 = inlined_call_operand.hbm [shape: f32[6,256], index: 1, kind: input, shape index: {}]
  %s2 = inlined_call_operand.vmem [shape: f32[6,1], index: 2, kind: output, shape index: {0}]
  %s3 = inlined_call_operand.vmem [shape: f32[6,1], index: 3, kind: output, shape index: {1}]
  %4 = xla_tuple %s2, %s3
  %s5 = sld [smem:[#allocation0]]
  $region42: #{tpu_custom_call.1} parent=0
    _
  %s7 = ssub.s32 1, %s5
  %s8 = scalar_select 0, %s7, %s5
  $region1: #{tpu_custom_call.1} parent=0
    #allocation2 [shape = 'u8[8192]{0}', space=vmem, size = 0x2000, scoped, tag = 'input window, operand 0, single buffered']
    #allocation3 [shape = 's32[1]{0}', space=sflag, size = 0x4, scoped, tag = 'scoped memory for tpu_custom_call.1']
    #allocation4 [shape = 'u8[8192]{0}', space=vmem, size = 0x2000, scoped, tag = 'input window, operand 1, single buffered']
    #allocation5 [shape = 's32[1]{0}', space=sflag, size = 0x4, scoped, tag = 'scoped memory for tpu_custom_call.1']
    %9 = vsyncpa [#allocation3], 0
    %10 = vsyncpa [#allocation5], 0
    // Predicated region
    $region2: #{tpu_custom_call.1} parent=1 // pred_check
      _
    $region3: #{tpu_custom_call.1} parent=1 // pred_check_branch
      %12 = sbr.rel (0) target = $region5
    $region4: #{tpu_custom_call.1} parent=1 // pred_region
      %s14 = ssub.s32 256, 256
      %15 = vsyncadd [#allocation3], %s14
      %s17 = sshll.u32 [#allocation2], 4
      %s18 = int_to_ptr.vmem [resolvable:$true] %s17
      %20 = dma.hbm_to_vmem [thread:$0]  %s0, 256, %s18, [#allocation3]
    $region5: #{tpu_custom_call.1} parent=1 // pred_fallthru
      _
    // Predicated region
    $region6: #{tpu_custom_call.1} parent=1 // pred_check
      _
    $region7: #{tpu_custom_call.1} parent=1 // pred_check_branch
      %22 = sbr.rel (0) target = $region9
    $region8: #{tpu_custom_call.1} parent=1 // pred_region
      %s24 = ssub.s32 256, 256
      %25 = vsyncadd [#allocation5], %s24
      %s27 = sshll.u32 [#allocation4], 4
      %s28 = int_to_ptr.vmem [resolvable:$true] %s27
      %30 = dma.hbm_to_vmem [thread:$0]  %s1, 256, %s28, [#allocation5]
    $region9: #{tpu_custom_call.1} parent=1 // pred_fallthru
      _
    // Predicated region
    $region10: #{tpu_custom_call.1} parent=1 // pred_check
      _
    $region11: #{tpu_custom_call.1} parent=1 // pred_check_branch
      %32 = sbr.rel (0) target = $region13
    $region12: #{tpu_custom_call.1} parent=1 // pred_region
      %33 = dma.done [#allocation3], 256
    $region13: #{tpu_custom_call.1} parent=1 // pred_fallthru
      _
    // Predicated region
    $region14: #{tpu_custom_call.1} parent=1 // pred_check
      _
    $region15: #{tpu_custom_call.1} parent=1 // pred_check_branch
      %35 = sbr.rel (0) target = $region17
    $region16: #{tpu_custom_call.1} parent=1 // pred_region
      %36 = dma.done [#allocation5], 256
    $region17: #{tpu_custom_call.1} parent=1 // pred_fallthru
      _
    %p37 = scmp.eq.s32.totalorder 0, 0
    // Predicated region
    $region18: #{tpu_custom_call.1} parent=1 // pred_check
      %p38 = pneg %p37
    $region19: #{tpu_custom_call.1} parent=1 // pred_check_branch
      %40 = sbr.rel (%p38) target = $region21
    $region20: #{tpu_custom_call.1} parent=1 // pred_region
      %vm41 = vcmask 5120
      %42 = vst.msk [vmem:[%s2] sm:$0x3f] %vm41, 0.0
      %43 = vst.msk [vmem:[%s3] sm:$0x3f] %vm41, 0.0
    $region21: #{tpu_custom_call.1} parent=1 // pred_fallthru
      _
    %v44 = vld [vmem:[#allocation2] sm:$0x3f]
    %v45 = vld [vmem:[#allocation2 + $0x8] sm:$0x3f]
    %v46 = vld [vmem:[#allocation4] sm:$0x3f]
    %v47 = vld [vmem:[#allocation4 + $0x8] sm:$0x3f]
    %v48 = vld [vmem:[%s2] sm:$0x3f]
    %vm49 = vcmask 1045504
    %v50 = vsel %vm49, %v44, 0.0
    %v51 = vsel %vm49, %v45, 0.0
    %v52 = vadd.f32 %v50, %v51
    %53 = vadd.xlane.f32.xlu0 %v52
    %v54 = vpop.xlane.xlu0 %53
    %v55 = vadd.f32 %v48, %v54
    %vm56 = vcmask 5120
    %57 = vst.msk [vmem:[%s2] sm:$0x3f] %vm56, %v55
    %v58 = vld [vmem:[%s3] sm:$0x3f]
    %v59 = vsel %vm49, %v46, 0.0
    %v60 = vsel %vm49, %v47, 0.0
    %v61 = vadd.f32 %v59, %v60
    %62 = vadd.xlane.f32.xlu0 %v61
    %v63 = vpop.xlane.xlu0 %62
    %v64 = vadd.f32 %v58, %v63
    %65 = vst.msk [vmem:[%s3] sm:$0x3f] %vm56, %v64
    // Predicated region
    $region22: #{tpu_custom_call.1} parent=1 // pred_check
      %p66 = pneg %p37
    $region23: #{tpu_custom_call.1} parent=1 // pred_check_branch
      %68 = sbr.rel (%p66) target = $region25
    $region24: #{tpu_custom_call.1} parent=1 // pred_region
      %v69 = vld [vmem:[%s2] sm:$0x3f]
      %v70 = vmul.f32 %v69, 0.00390625
      %71 = vst.msk [vmem:[%s2] sm:$0x3f] %vm56, %v70
      %v72 = vld [vmem:[%s3] sm:$0x3f]
      %v73 = vmul.f32 %v72, 0.00390625
      %74 = vst.msk [vmem:[%s3] sm:$0x3f] %vm56, %v73
    $region25: #{tpu_custom_call.1} parent=1 // pred_fallthru
      _
    // Predicated region
    $region26: #{tpu_custom_call.1} parent=1 // pred_check
      _
    $region27: #{tpu_custom_call.1} parent=1 // pred_check_branch
      %76 = sbr.rel (0) target = $region29
    $region28: #{tpu_custom_call.1} parent=1 // pred_region
      _
    $region29: #{tpu_custom_call.1} parent=1 // pred_fallthru
      _
    // Predicated region
    $region30: #{tpu_custom_call.1} parent=1 // pred_check
      _
    $region31: #{tpu_custom_call.1} parent=1 // pred_check_branch
      %78 = sbr.rel (0) target = $region33
    $region32: #{tpu_custom_call.1} parent=1 // pred_region
      _
    $region33: #{tpu_custom_call.1} parent=1 // pred_fallthru
      _
    // Predicated region
    $region34: #{tpu_custom_call.1} parent=1 // pred_check
      _
    $region35: #{tpu_custom_call.1} parent=1 // pred_check_branch
      %80 = sbr.rel (0) target = $region37
    $region36: #{tpu_custom_call.1} parent=1 // pred_region
      _
    $region37: #{tpu_custom_call.1} parent=1 // pred_fallthru
      _
    // Predicated region
    $region38: #{tpu_custom_call.1} parent=1 // pred_check
      _
    $region39: #{tpu_custom_call.1} parent=1 // pred_check_branch
      %82 = sbr.rel (0) target = $region41
    $region40: #{tpu_custom_call.1} parent=1 // pred_region
      _
    $region41: #{tpu_custom_call.1} parent=1 // pred_fallthru
      _
    %83 = vsyncpa [#allocation3], 1
    %84 = vsyncpa [#allocation5], 1

</llo_original>
